<compile_context>
chip_gen: v5e
topology: v5e:2x2
jax: 0.10.0
libtpu: 0.0.40
codegen_flags: <defaults>
</compile_context>

<pallas_src>
from functools import partial

import jax
import jax.numpy as jnp
from jax import lax
from jax.experimental import pallas as pl
from jax.experimental.pallas import tpu as pltpu


def _sigmoid(z):
    # sigmoid(x) == 0.5 * (tanh(x/2) + 1): single EUP op per element.
    return 0.5 * (jnp.tanh(0.5 * z) + 1.0)


def _cross_gating_kernel(u_ref, s_ref, wu_ref, bu_ref, ws_ref, bs_ref,
                         u_out_ref, s_out_ref, *, matmul_dtype):
    u = u_ref[...]                       # (TM, D)
    s = s_ref[...]                       # (TM, D)

    u_mm = u if matmul_dtype is None else u.astype(matmul_dtype)
    s_mm = s if matmul_dtype is None else s.astype(matmul_dtype)

    # Weights stay in torch Linear (out, in) layout; contract over the "in"
    # axis of both operands (x @ W^T). MXU handles the transposed RHS natively.
    contract = (((1,), (1,)), ((), ()))

    # g_u = sigmoid(u @ Wu^T + bu) ; s_out = s * g_u
    z_u = lax.dot_general(u_mm, wu_ref[...], contract,
                          preferred_element_type=jnp.float32) + bu_ref[...]
    s_out_ref[...] = (s * _sigmoid(z_u)).astype(s_out_ref.dtype)

    # g_s = sigmoid(s @ Ws^T + bs) ; u_out = u * g_s
    z_s = lax.dot_general(s_mm, ws_ref[...], contract,
                          preferred_element_type=jnp.float32) + bs_ref[...]
    u_out_ref[...] = (u * _sigmoid(z_s)).astype(u_out_ref.dtype)


def _round_up(x, m):
    return ((x + m - 1) // m) * m


def cross_gating(u, s, w_u, b_u, w_s, b_s, *, matmul_dtype=None,
                 max_block_rows=4096):
    """u, s: (B, S, D). w_*: (D, D) torch-Linear layout (out, in). b_*: (D,).

    matmul_dtype: e.g. jnp.bfloat16 to feed bf16 operands to the MXU
    (f32 accumulation preserved). None keeps exact f32 semantics.
    """
    B, S, D = u.shape
    N = B * S
    SUB = 8

    if matmul_dtype is not None:
        w_u = w_u.astype(matmul_dtype)
        w_s = w_s.astype(matmul_dtype)
    b_u2 = b_u.reshape(1, D).astype(jnp.float32)
    b_s2 = b_s.reshape(1, D).astype(jnp.float32)

    # Free row-major views — no padding, no HBM copies.
    u2 = u.reshape(N, D)
    s2 = s.reshape(N, D)

    # ---- Generation-aware VMEM budget --------------------------------------
    try:
        vmem_phys = getattr(pltpu.get_tpu_info(), "vmem_capacity_bytes",
                            64 * 1024 * 1024)
    except Exception:  # be conservative if the query is unavailable
        vmem_phys = 64 * 1024 * 1024
    if vmem_phys >= 100 * 1024 * 1024:        # v5e / v6e: 128 MiB physical
        vmem_limit = 64 * 1024 * 1024
        budget = 48 * 1024 * 1024
    else:                                     # v7x: ~64 MiB per TensorCore
        vmem_limit = 32 * 1024 * 1024
        budget = 24 * 1024 * 1024

    act_itemsize = jnp.dtype(u.dtype).itemsize
    w_itemsize = jnp.dtype(w_u.dtype).itemsize
    # Single-buffered resident params (weights + f32 biases).
    param_bytes = 2 * D * D * w_itemsize + 2 * D * 4

    def tile_bytes(tm):
        streams = 4 * 2 * tm * D * act_itemsize        # u,s,u_out,s_out x 2 bufs
        zbuf = 2 * tm * D * 4                          # z_u, z_s f32
        gates = 2 * tm * D * 4                         # gate temporaries headroom
        cast = (2 * tm * D * jnp.dtype(matmul_dtype).itemsize
                if matmul_dtype is not None else 0)    # bf16 copies of u, s
        return streams + zbuf + gates + cast + param_bytes

    # Largest budget-fitting row tile (multiple of 8 sublanes), capped.
    tm = max(SUB, min(_round_up(N, SUB), _round_up(max_block_rows, SUB)))
    while tm > SUB and tile_bytes(tm) > budget:
        tm = max(SUB, _round_up(tm // 2, SUB))

    # Keep enough grid steps for pipelining and v7x megacore sharding of the
    # "parallel" row axis, as long as each stream block stays >= ~1 MiB;
    # at minimum keep >= 2 steps when N allows it.
    min_rows = max(SUB, _round_up((1 << 20) // max(1, D * act_itemsize), SUB))
    want8 = _round_up(pl.cdiv(N, 8), SUB)
    if want8 >= min_rows:
        tm = min(tm, want8)
    elif N > SUB and tm >= N:
        tm = min(tm, max(SUB, _round_up(pl.cdiv(N, 2), SUB)))

    grid = (pl.cdiv(N, tm),)

    row_spec = pl.BlockSpec((tm, D), lambda i: (i, 0))
    resident = pl.BlockSpec(memory_space=pltpu.MemorySpace.VMEM)  # whole array, 1 buffer

    kernel = partial(_cross_gating_kernel, matmul_dtype=matmul_dtype)

    u_out, s_out = pl.pallas_call(
        kernel,
        out_shape=(jax.ShapeDtypeStruct((N, D), u.dtype),
                   jax.ShapeDtypeStruct((N, D), s.dtype)),
        grid=grid,
        in_specs=[
            row_spec,    # u rows (pipelined, double-buffered)
            row_spec,    # s rows (pipelined, double-buffered)
            resident,    # W_u (out, in) — resident, single-buffered
            resident,    # b_u (1, D)
            resident,    # W_s (out, in)
            resident,    # b_s (1, D)
        ],
        out_specs=(row_spec, row_spec),
        compiler_params=pltpu.CompilerParams(
            dimension_semantics=("parallel",),
            vmem_limit_bytes=vmem_limit),
    )(u2, s2, w_u, b_u2, w_s, b_s2)

    return u_out.reshape(B, S, D), s_out.reshape(B, S, D)


def _reference(u, s, w_u, b_u, w_s, b_s):
    g_u = jax.nn.sigmoid(u @ w_u.T + b_u)
    s_out = s * g_u
    g_s = jax.nn.sigmoid(s @ w_s.T + b_s)
    u_out = u * g_s
    return u_out, s_out


if __name__ == "__main__":
    key = jax.random.PRNGKey(0)
    B, S, D = 2, 8, 32  # batch, seq, d_model

    k_u, k_s, k_wu, k_bu, k_ws, k_bs = jax.random.split(key, 6)
    u = jax.random.normal(k_u, (B, S, D), dtype=jnp.float32)
    s = jax.random.normal(k_s, (B, S, D), dtype=jnp.float32)

    # Deterministic "Linear" params: weight (D, D) torch (out, in) layout, bias (D,).
    bound = 1.0 / (D ** 0.5)
    w_u = jax.random.uniform(k_wu, (D, D), jnp.float32, -bound, bound)
    b_u = jax.random.uniform(k_bu, (D,), jnp.float32, -bound, bound)
    w_s = jax.random.uniform(k_ws, (D, D), jnp.float32, -bound, bound)
    b_s = jax.random.uniform(k_bs, (D,), jnp.float32, -bound, bound)

    u_ref, s_ref = _reference(u, s, w_u, b_u, w_s, b_s)

    # Exact f32 path (default): strict tolerance.
    u_out, s_out = cross_gating(u, s, w_u, b_u, w_s, b_s)
    jax.block_until_ready((u_out, s_out))
    assert jnp.allclose(u_out, u_ref, atol=1e-5, rtol=1e-5), "u_out mismatch (f32)"
    assert jnp.allclose(s_out, s_ref, atol=1e-5, rtol=1e-5), "s_out mismatch (f32)"

    # bf16 MXU-operand path (recommended for production): relaxed tolerance
    # (expected bf16 quantization error, not a kernel bug).
    u_bf, s_bf = cross_gating(u, s, w_u, b_u, w_s, b_s, matmul_dtype=jnp.bfloat16)
    jax.block_until_ready((u_bf, s_bf))
    assert jnp.allclose(u_bf, u_ref, atol=5e-2, rtol=5e-2), "u_out mismatch (bf16)"
    assert jnp.allclose(s_bf, s_ref, atol=5e-2, rtol=5e-2), "s_out mismatch (bf16)"

    print("KERNEL_OK")
</pallas_src>

<mosaic_0001>
module attributes {stable_mosaic.version = 11 : i64} {
  func.func @_cross_gating_kernel(%arg0: i32, %arg1: memref<8x32xf32, #tpu.memory_space<vmem>>, %arg2: memref<8x32xf32, #tpu.memory_space<vmem>>, %arg3: memref<32x32xf32, #tpu.memory_space<vmem>>, %arg4: memref<1x32xf32, #tpu.memory_space<vmem>>, %arg5: memref<32x32xf32, #tpu.memory_space<vmem>>, %arg6: memref<1x32xf32, #tpu.memory_space<vmem>>, %arg7: memref<8x32xf32, #tpu.memory_space<vmem>>, %arg8: memref<8x32xf32, #tpu.memory_space<vmem>>) attributes {dimension_semantics = [#tpu.dimension_semantics<parallel>], iteration_bounds = array<i64: 2>, scalar_prefetch = 0 : i64, scratch_operands = 0 : i64, tpu.core_type = #tpu.core_type<tc>, window_params = [{transform_indices = @transform_0, window_bounds = array<i64: 8, 32>}, {transform_indices = @transform_1, window_bounds = array<i64: 8, 32>}, {pipeline_mode = #tpu.pipeline_mode<synchronous>, transform_indices = @transform_2, window_bounds = array<i64: 32, 32>}, {pipeline_mode = #tpu.pipeline_mode<synchronous>, transform_indices = @transform_3, window_bounds = array<i64: 1, 32>}, {pipeline_mode = #tpu.pipeline_mode<synchronous>, transform_indices = @transform_4, window_bounds = array<i64: 32, 32>}, {pipeline_mode = #tpu.pipeline_mode<synchronous>, transform_indices = @transform_5, window_bounds = array<i64: 1, 32>}, {transform_indices = @transform_6, window_bounds = array<i64: 8, 32>}, {transform_indices = @transform_7, window_bounds = array<i64: 8, 32>}]} {
    %c0 = arith.constant 0 : index
    %c0_0 = arith.constant 0 : index
    %0 = vector.load %arg1[%c0, %c0_0] : memref<8x32xf32, #tpu.memory_space<vmem>>, vector<8x32xf32>
    %c0_1 = arith.constant 0 : index
    %c0_2 = arith.constant 0 : index
    %1 = vector.load %arg2[%c0_1, %c0_2] : memref<8x32xf32, #tpu.memory_space<vmem>>, vector<8x32xf32>
    %c0_3 = arith.constant 0 : index
    %c0_4 = arith.constant 0 : index
    %2 = vector.load %arg3[%c0_3, %c0_4] : memref<32x32xf32, #tpu.memory_space<vmem>>, vector<32x32xf32>
    %cst = arith.constant dense<0.000000e+00> : vector<8x32xf32>
    %3 = tpu.matmul %0, %2, %cst {dimension_numbers = #tpu.dot_dimension_numbers<[1], [1], [0], [0], [0, 0, 1, 0], [], []>} : vector<8x32xf32>, vector<32x32xf32>, vector<8x32xf32> -> vector<8x32xf32>
    %c0_5 = arith.constant 0 : index
    %c0_6 = arith.constant 0 : index
    %4 = vector.load %arg4[%c0_5, %c0_6] : memref<1x32xf32, #tpu.memory_space<vmem>>, vector<1x32xf32>
    %5 = vector.broadcast %4 : vector<1x32xf32> to vector<8x32xf32>
    %6 = arith.addf %3, %5 : vector<8x32xf32>
    %cst_7 = arith.constant 5.000000e-01 : f32
    %7 = vector.broadcast %cst_7 : f32 to vector<8x32xf32>
    %8 = arith.mulf %7, %6 : vector<8x32xf32>
    %9 = math.tanh %8 : vector<8x32xf32>
    %cst_8 = arith.constant 1.000000e+00 : f32
    %10 = vector.broadcast %cst_8 : f32 to vector<8x32xf32>
    %11 = arith.addf %9, %10 : vector<8x32xf32>
    %cst_9 = arith.constant 5.000000e-01 : f32
    %12 = vector.broadcast %cst_9 : f32 to vector<8x32xf32>
    %13 = arith.mulf %12, %11 : vector<8x32xf32>
    %14 = arith.mulf %1, %13 : vector<8x32xf32>
    %c0_10 = arith.constant 0 : index
    %c0_11 = arith.constant 0 : index
    %15 = vector.load %arg8[%c0_10, %c0_11] : memref<8x32xf32, #tpu.memory_space<vmem>>, vector<8x32xf32>
    tpu.vector_store %arg8[%c0_10, %c0_11], %14 {strides = array<i32>} : memref<8x32xf32, #tpu.memory_space<vmem>>, vector<8x32xf32>,
    %c0_12 = arith.constant 0 : index
    %c0_13 = arith.constant 0 : index
    %16 = vector.load %arg5[%c0_12, %c0_13] : memref<32x32xf32, #tpu.memory_space<vmem>>, vector<32x32xf32>
    %cst_14 = arith.constant dense<0.000000e+00> : vector<8x32xf32>
    %17 = tpu.matmul %1, %16, %cst_14 {dimension_numbers = #tpu.dot_dimension_numbers<[1], [1], [0], [0], [0, 0, 1, 0], [], []>} : vector<8x32xf32>, vector<32x32xf32>, vector<8x32xf32> -> vector<8x32xf32>
    %c0_15 = arith.constant 0 : index
    %c0_16 = arith.constant 0 : index
    %18 = vector.load %arg6[%c0_15, %c0_16] : memref<1x32xf32, #tpu.memory_space<vmem>>, vector<1x32xf32>
    %19 = vector.broadcast %18 : vector<1x32xf32> to vector<8x32xf32>
    %20 = arith.addf %17, %19 : vector<8x32xf32>
    %cst_17 = arith.constant 5.000000e-01 : f32
    %21 = vector.broadcast %cst_17 : f32 to vector<8x32xf32>
    %22 = arith.mulf %21, %20 : vector<8x32xf32>
    %23 = math.tanh %22 : vector<8x32xf32>
    %cst_18 = arith.constant 1.000000e+00 : f32
    %24 = vector.broadcast %cst_18 : f32 to vector<8x32xf32>
    %25 = arith.addf %23, %24 : vector<8x32xf32>
    %cst_19 = arith.constant 5.000000e-01 : f32
    %26 = vector.broadcast %cst_19 : f32 to vector<8x32xf32>
    %27 = arith.mulf %26, %25 : vector<8x32xf32>
    %28 = arith.mulf %0, %27 : vector<8x32xf32>
    %c0_20 = arith.constant 0 : index
    %c0_21 = arith.constant 0 : index
    %29 = vector.load %arg7[%c0_20, %c0_21] : memref<8x32xf32, #tpu.memory_space<vmem>>, vector<8x32xf32>
    tpu.vector_store %arg7[%c0_20, %c0_21], %28 {strides = array<i32>} : memref<8x32xf32, #tpu.memory_space<vmem>>, vector<8x32xf32>,
    return
  }
  func.func @transform_0(%arg0: i32) -> (i32, i32) {
    %c0_i32 = arith.constant 0 : i32
    %c0_i32_0 = arith.constant 0 : i32
    return %arg0, %c0_i32 : i32, i32
  }
  func.func @transform_1(%arg0: i32) -> (i32, i32) {
    %c0_i32 = arith.constant 0 : i32
    %c0_i32_0 = arith.constant 0 : i32
    return %arg0, %c0_i32 : i32, i32
  }
  func.func @transform_2(%arg0: i32) -> (i32, i32) {
    %c0_i32 = arith.constant 0 : i32
    %c0_i32_0 = arith.constant 0 : i32
    %c0_i32_1 = arith.constant 0 : i32
    return %c0_i32, %c0_i32_0 : i32, i32
  }
  func.func @transform_3(%arg0: i32) -> (i32, i32) {
    %c0_i32 = arith.constant 0 : i32
    %c0_i32_0 = arith.constant 0 : i32
    %c0_i32_1 = arith.constant 0 : i32
    return %c0_i32, %c0_i32_0 : i32, i32
  }
  func.func @transform_4(%arg0: i32) -> (i32, i32) {
    %c0_i32 = arith.constant 0 : i32
    %c0_i32_0 = arith.constant 0 : i32
    %c0_i32_1 = arith.constant 0 : i32
    return %c0_i32, %c0_i32_0 : i32, i32
  }
  func.func @transform_5(%arg0: i32) -> (i32, i32) {
    %c0_i32 = arith.constant 0 : i32
    %c0_i32_0 = arith.constant 0 : i32
    %c0_i32_1 = arith.constant 0 : i32
    return %c0_i32, %c0_i32_0 : i32, i32
  }
  func.func @transform_6(%arg0: i32) -> (i32, i32) {
    %c0_i32 = arith.constant 0 : i32
    %c0_i32_0 = arith.constant 0 : i32
    return %arg0, %c0_i32 : i32, i32
  }
  func.func @transform_7(%arg0: i32) -> (i32, i32) {
    %c0_i32 = arith.constant 0 : i32
    %c0_i32_0 = arith.constant 0 : i32
    return %arg0, %c0_i32 : i32, i32
  }
}

</mosaic_0001>

<llo_original>
// kernel: tpu_custom_call.1
$region0: #{tpu_custom_call.1}
  #allocation0 [shape = 'u32[]', space=smem, size = 0x4, offset = 0x4, fixed_abs, tag = 'smem constant byte address 0x4 - core index']
  #allocation1 [shape = 'u32[72,128]{1,0:T(1,128)}', space=vmem, size = 0x9000, scoped, tag = 'internal scratch']
  %s0 = inlined_call_operand.hbm [shape: f32[16,32], index: 0, kind: input, shape index: {}]
  %s1 = inlined_call_operand.hbm [shape: f32[16,32], index: 1, kind: input, shape index: {}]
  %s2 = inlined_call_operand.hbm [shape: f32[32,32], index: 2, kind: input, shape index: {}]
  %s3 = inlined_call_operand.vmem [shape: f32[1,32], index: 3, kind: input, shape index: {}]
  %s4 = inlined_call_operand.hbm [shape: f32[32,32], index: 4, kind: input, shape index: {}]
  %s5 = inlined_call_operand.vmem [shape: f32[1,32], index: 5, kind: input, shape index: {}]
  %s6 = inlined_call_operand.hbm [shape: f32[16,32], index: 6, kind: output, shape index: {0}]
  %s7 = inlined_call_operand.hbm [shape: f32[16,32], index: 7, kind: output, shape index: {1}]
  %8 = xla_tuple %s6, %s7
  %s9 = sld [smem:[#allocation0]]
  $region81: #{tpu_custom_call.1} parent=0
    _
  %s11 = ssub.s32 1, %s9
  %s12 = scalar_select 0, %s11, %s9
  $region1: #{tpu_custom_call.1} parent=0
    #allocation2 [shape = 'u8[8192]{0}', space=vmem, size = 0x2000, scoped, tag = 'input window, operand 0']
    #allocation3 [shape = 's32[2]{0}', space=sflag, size = 0x8, scoped, tag = 'scoped memory for tpu_custom_call.1']
    #allocation4 [shape = 's32[2]{0}', space=sflag, size = 0x8, scoped, tag = 'scoped memory for tpu_custom_call.1']
    #allocation5 [shape = 'u8[8192]{0}', space=vmem, size = 0x2000, scoped, tag = 'input window, operand 1']
    #allocation6 [shape = 's32[2]{0}', space=sflag, size = 0x8, scoped, tag = 'scoped memory for tpu_custom_call.1']
    #allocation7 [shape = 'u8[16384]{0}', space=vmem, size = 0x4000, scoped, tag = 'input window, operand 2, single buffered']
    #allocation8 [shape = 'u8[16384]{0}', space=vmem, size = 0x4000, scoped, tag = 'input window, operand 4, single buffered']
    #allocation9 [shape = 's32[1]{0}', space=sflag, size = 0x4, scoped, tag = 'scoped memory for tpu_custom_call.1']
    #allocation10 [shape = 'u8[8192]{0}', space=vmem, size = 0x2000, scoped, tag = 'output window, operand 0']
    #allocation11 [shape = 'u8[8192]{0}', space=vmem, size = 0x2000, scoped, tag = 'output window, operand 1']
    #allocation12 [shape = 's32[2]{0}', space=sflag, size = 0x8, scoped, tag = 'scoped memory for tpu_custom_call.1']
    %13 = vsyncpa [#allocation3], 0
    %s14 = scalar_lea.sflag [#allocation3], 1
    %15 = vsyncpa %s14, 0
    %16 = vsyncpa [#allocation6], 0
    %s17 = scalar_lea.sflag [#allocation6], 1
    %18 = vsyncpa %s17, 0
    %19 = vsyncpa [#allocation9], 0
    %20 = vsyncpa [#allocation4], 0
    %s21 = scalar_lea.sflag [#allocation4], 1
    %22 = vsyncpa %s21, 0
    %23 = vsyncpa [#allocation12], 0
    %s24 = scalar_lea.sflag [#allocation12], 1
    %25 = vsyncpa %s24, 0
    loop: start=0, step=1, limit=4
    $region2: #{tpu_custom_call.1} parent=1 // loop_pre_header
      _
    $region3: #{tpu_custom_call.1} parent=1 // loop_header
      %s27 = sphi 0, %s31
      %p28 = scmp.ge.s32.totalorder %s27, 4
      %s37 = sphi 0, %s39
      %s40 = sphi 0, %s37
      %s41 = sphi 0, %s40
      %s57 = sphi 0, %s41
      %s63 = sphi 0, %s65
      %s66 = sphi 0, %s63
      %s67 = sphi 0, %s66
      %s83 = sphi 0, %s67
      %s87 = sphi 0, %s87
      %s89 = sphi 0, %s87
      %s90 = sphi 0, %s89
      %s104 = sphi 0, %s90
      %s108 = sphi 0, %s108
      %s110 = sphi 0, %s108
      %s111 = sphi 0, %s110
      %s125 = sphi 0, %s111
      %s129 = sphi 0, %s129
      %s131 = sphi 0, %s129
      %s132 = sphi 0, %s131
      %s146 = sphi 0, %s132
      %s150 = sphi 0, %s150
      %s152 = sphi 0, %s150
      %s153 = sphi 0, %s152
      %s167 = sphi 0, %s153
      %s173 = sphi 0, %s175
      %s176 = sphi 0, %s173
      %s177 = sphi 0, %s176
      %s193 = sphi 0, %s177
      %s199 = sphi 0, %s201
      %s202 = sphi 0, %s199
      %s203 = sphi 0, %s202
      %s219 = sphi 0, %s203
    $region4: #{tpu_custom_call.1} parent=1 // loop_header_branch
      %30 = sbr.rel (%p28) target = $region8
    $region5: #{tpu_custom_call.1} parent=1 // loop_body
      %s32 = ssub.s32 %s27, 1
      %s33 = ssub.s32 %s27, 2
      %s34 = sadd.s32 %s27, 1
      %s35 = ssub.s32 %s27, %s34
      %p36 = scmp.eq.s32.totalorder %s35, 0
      %s38 = sadd.s32 %s37, 1
      %s39 = scalar_select %p36, %s37, %s38
      %p42 = pneg %p36
      %p43 = scmp.eq.s32.totalorder %s27, 1
      %p44 = por %p42, %p43
      %p45 = scmp.ne.s32.totalorder %s37, %s40
      %p46 = scmp.eq.s32.totalorder %s27, 0
      %p47 = por %p45, %p46
      %p48 = scmp.ne.s32.totalorder %s37, %s40
      %p49 = scmp.eq.s32.totalorder %s32, 1
      %p50 = por %p48, %p49
      %p51 = scmp.ne.s32.totalorder %s40, %s41
      %p52 = scmp.eq.s32.totalorder %s32, 0
      %p53 = por %p51, %p52
      %p54 = scmp.ne.s32.totalorder %s40, %s41
      %p55 = scmp.eq.s32.totalorder %s33, 1
      %p56 = por %p54, %p55
      %p58 = scmp.ne.s32.totalorder %s41, %s57
      %p59 = scmp.eq.s32.totalorder %s33, 0
      %p60 = por %p58, %p59
      %s61 = ssub.s32 %s27, %s34
      %p62 = scmp.eq.s32.totalorder %s61, 0
      %s64 = sadd.s32 %s63, 1
      %s65 = scalar_select %p62, %s63, %s64
      %p68 = pneg %p62
      %p69 = scmp.eq.s32.totalorder %s27, 1
      %p70 = por %p68, %p69
      %p71 = scmp.ne.s32.totalorder %s63, %s66
      %p72 = scmp.eq.s32.totalorder %s27, 0
      %p73 = por %p71, %p72
      %p74 = scmp.ne.s32.totalorder %s63, %s66
      %p75 = scmp.eq.s32.totalorder %s32, 1
      %p76 = por %p74, %p75
      %p77 = scmp.ne.s32.totalorder %s66, %s67
      %p78 = scmp.eq.s32.totalorder %s32, 0
      %p79 = por %p77, %p78
      %p80 = scmp.ne.s32.totalorder %s66, %s67
      %p81 = scmp.eq.s32.totalorder %s33, 1
      %p82 = por %p80, %p81
      %p84 = scmp.ne.s32.totalorder %s67, %s83
      %p85 = scmp.eq.s32.totalorder %s33, 0
      %p86 = por %p84, %p85
      %s88 = sadd.s32 %s87, 1
      %p91 = scmp.eq.s32.totalorder %s27, 1
      %p92 = scmp.ne.s32.totalorder %s87, %s89
      %p93 = scmp.eq.s32.totalorder %s27, 0
      %p94 = por %p92, %p93
      %p95 = scmp.ne.s32.totalorder %s87, %s89
      %p96 = scmp.eq.s32.totalorder %s32, 1
      %p97 = por %p95, %p96
      %p98 = scmp.ne.s32.totalorder %s89, %s90
      %p99 = scmp.eq.s32.totalorder %s32, 0
      %p100 = por %p98, %p99
      %p101 = scmp.ne.s32.totalorder %s89, %s90
      %p102 = scmp.eq.s32.totalorder %s33, 1
      %p103 = por %p101, %p102
      %p105 = scmp.ne.s32.totalorder %s90, %s104
      %p106 = scmp.eq.s32.totalorder %s33, 0
      %p107 = por %p105, %p106
      %s109 = sadd.s32 %s108, 1
      %p112 = scmp.eq.s32.totalorder %s27, 1
      %p113 = scmp.ne.s32.totalorder %s108, %s110
      %p114 = scmp.eq.s32.totalorder %s27, 0
      %p115 = por %p113, %p114
      %p116 = scmp.ne.s32.totalorder %s108, %s110
      %p117 = scmp.eq.s32.totalorder %s32, 1
      %p118 = por %p116, %p117
      %p119 = scmp.ne.s32.totalorder %s110, %s111
      %p120 = scmp.eq.s32.totalorder %s32, 0
      %p121 = por %p119, %p120
      %p122 = scmp.ne.s32.totalorder %s110, %s111
      %p123 = scmp.eq.s32.totalorder %s33, 1
      %p124 = por %p122, %p123
      %p126 = scmp.ne.s32.totalorder %s111, %s125
      %p127 = scmp.eq.s32.totalorder %s33, 0
      %p128 = por %p126, %p127
      %s130 = sadd.s32 %s129, 1
      %p133 = scmp.eq.s32.totalorder %s27, 1
      %p134 = scmp.ne.s32.totalorder %s129, %s131
      %p135 = scmp.eq.s32.totalorder %s27, 0
      %p136 = por %p134, %p135
      %p137 = scmp.ne.s32.totalorder %s129, %s131
      %p138 = scmp.eq.s32.totalorder %s32, 1
      %p139 = por %p137, %p138
      %p140 = scmp.ne.s32.totalorder %s131, %s132
      %p141 = scmp.eq.s32.totalorder %s32, 0
      %p142 = por %p140, %p141
      %p143 = scmp.ne.s32.totalorder %s131, %s132
      %p144 = scmp.eq.s32.totalorder %s33, 1
      %p145 = por %p143, %p144
      %p147 = scmp.ne.s32.totalorder %s132, %s146
      %p148 = scmp.eq.s32.totalorder %s33, 0
      %p149 = por %p147, %p148
      %s151 = sadd.s32 %s150, 1
      %p154 = scmp.eq.s32.totalorder %s27, 1
      %p155 = scmp.ne.s32.totalorder %s150, %s152
      %p156 = scmp.eq.s32.totalorder %s27, 0
      %p157 = por %p155, %p156
      %p158 = scmp.ne.s32.totalorder %s150, %s152
      %p159 = scmp.eq.s32.totalorder %s32, 1
      %p160 = por %p158, %p159
      %p161 = scmp.ne.s32.totalorder %s152, %s153
      %p162 = scmp.eq.s32.totalorder %s32, 0
      %p163 = por %p161, %p162
      %p164 = scmp.ne.s32.totalorder %s152, %s153
      %p165 = scmp.eq.s32.totalorder %s33, 1
      %p166 = por %p164, %p165
      %p168 = scmp.ne.s32.totalorder %s153, %s167
      %p169 = scmp.eq.s32.totalorder %s33, 0
      %p170 = por %p168, %p169
      %s171 = ssub.s32 %s27, %s34
      %p172 = scmp.eq.s32.totalorder %s171, 0
      %s174 = sadd.s32 %s173, 1
      %s175 = scalar_select %p172, %s173, %s174
      %p178 = pneg %p172
      %p179 = scmp.eq.s32.totalorder %s27, 1
      %p180 = por %p178, %p179
      %p181 = scmp.ne.s32.totalorder %s173, %s176
      %p182 = scmp.eq.s32.totalorder %s27, 0
      %p183 = por %p181, %p182
      %p184 = scmp.ne.s32.totalorder %s173, %s176
      %p185 = scmp.eq.s32.totalorder %s32, 1
      %p186 = por %p184, %p185
      %p187 = scmp.ne.s32.totalorder %s176, %s177
      %p188 = scmp.eq.s32.totalorder %s32, 0
      %p189 = por %p187, %p188
      %p190 = scmp.ne.s32.totalorder %s176, %s177
      %p191 = scmp.eq.s32.totalorder %s33, 1
      %p192 = por %p190, %p191
      %p194 = scmp.ne.s32.totalorder %s177, %s193
      %p195 = scmp.eq.s32.totalorder %s33, 0
      %p196 = por %p194, %p195
      %s197 = ssub.s32 %s27, %s34
      %p198 = scmp.eq.s32.totalorder %s197, 0
      %s200 = sadd.s32 %s199, 1
      %s201 = scalar_select %p198, %s199, %s200
      %p204 = pneg %p198
      %p205 = scmp.eq.s32.totalorder %s27, 1
      %p206 = por %p204, %p205
      %p207 = scmp.ne.s32.totalorder %s199, %s202
      %p208 = scmp.eq.s32.totalorder %s27, 0
      %p209 = por %p207, %p208
      %p210 = scmp.ne.s32.totalorder %s199, %s202
      %p211 = scmp.eq.s32.totalorder %s32, 1
      %p212 = por %p210, %p211
      %p213 = scmp.ne.s32.totalorder %s202, %s203
      %p214 = scmp.eq.s32.totalorder %s32, 0
      %p215 = por %p213, %p214
      %p216 = scmp.ne.s32.totalorder %s202, %s203
      %p217 = scmp.eq.s32.totalorder %s33, 1
      %p218 = por %p216, %p217
      %p220 = scmp.ne.s32.totalorder %s203, %s219
      %p221 = scmp.eq.s32.totalorder %s33, 0
      %p222 = por %p220, %p221
      %p223 = scmp.le.s32.totalorder 1, %s27
      %p224 = scmp.lt.s32.totalorder %s27, 3
      %p225 = pnand %p223, %p224
      %p226 = pneg %p225
      // Predicated region
      $region9: #{tpu_custom_call.1} parent=5 // pred_check
        _
      $region10: #{tpu_custom_call.1} parent=5 // pred_check_branch
        %228 = sbr.rel (%p225) target = $region12
      $region11: #{tpu_custom_call.1} parent=5 // pred_region
        %s229 = ssub.s32 %s27, 1
        // Predicated region
        $region13: #{tpu_custom_call.1} parent=11 // pred_check
          %p230 = pneg %p100
        $region14: #{tpu_custom_call.1} parent=11 // pred_check_branch
          %232 = sbr.rel (%p230) target = $region16
        $region15: #{tpu_custom_call.1} parent=11 // pred_region
          %234 = vsyncadd [#allocation6], 0
          %s235 = sshll.u32 %s2, 4
          %s236 = int_to_ptr.hbm [resolvable:$true] %s235
          %s237 = sshll.u32 [#allocation7], 4
          %s238 = int_to_ptr.vmem [resolvable:$true] %s237
          %243 = dma.hbm_to_vmem [thread:$0]  %s236, 512, %s238, [#allocation6], 128, 128, 8
        $region16: #{tpu_custom_call.1} parent=11 // pred_fallthru
          _
        // Predicated region
        $region17: #{tpu_custom_call.1} parent=11 // pred_check
          %p244 = pneg %p121
        $region18: #{tpu_custom_call.1} parent=11 // pred_check_branch
          %246 = sbr.rel (%p244) target = $region20
        $region19: #{tpu_custom_call.1} parent=11 // pred_region
          _
        $region20: #{tpu_custom_call.1} parent=11 // pred_fallthru
          _
        // Predicated region
        $region21: #{tpu_custom_call.1} parent=11 // pred_check
          %p247 = pneg %p142
        $region22: #{tpu_custom_call.1} parent=11 // pred_check_branch
          %249 = sbr.rel (%p247) target = $region24
        $region23: #{tpu_custom_call.1} parent=11 // pred_region
          %251 = vsyncadd [#allocation9], 0
          %s252 = sshll.u32 %s4, 4
          %s253 = int_to_ptr.hbm [resolvable:$true] %s252
          %s254 = sshll.u32 [#allocation8], 4
          %s255 = int_to_ptr.vmem [resolvable:$true] %s254
          %260 = dma.hbm_to_vmem [thread:$0]  %s253, 512, %s255, [#allocation9], 128, 128, 8
        $region24: #{tpu_custom_call.1} parent=11 // pred_fallthru
          _
        // Predicated region
        $region25: #{tpu_custom_call.1} parent=11 // pred_check
          %p261 = pneg %p163
        $region26: #{tpu_custom_call.1} parent=11 // pred_check_branch
          %263 = sbr.rel (%p261) target = $region28
        $region27: #{tpu_custom_call.1} parent=11 // pred_region
          _
        $region28: #{tpu_custom_call.1} parent=11 // pred_fallthru
          _
      $region12: #{tpu_custom_call.1} parent=5 // pred_fallthru
        _
      %p264 = scmp.lt.s32.totalorder %s27, 2
      // Predicated region
      $region29: #{tpu_custom_call.1} parent=5 // pred_check
        %p265 = pneg %p264
      $region30: #{tpu_custom_call.1} parent=5 // pred_check_branch
        %267 = sbr.rel (%p265) target = $region32
      $region31: #{tpu_custom_call.1} parent=5 // pred_region
        // Predicated region
        $region33: #{tpu_custom_call.1} parent=31 // pred_check
          %p268 = pneg %p47
        $region34: #{tpu_custom_call.1} parent=31 // pred_check_branch
          %270 = sbr.rel (%p268) target = $region36
        $region35: #{tpu_custom_call.1} parent=31 // pred_region
          %s271 = sand.u32 %s37, 1
          %s272 = scalar_lea.sflag [#allocation3], %s271
          %s273 = sand.u32 %s37, 1
          %s274 = smul.addr %s273, 8
          %s275 = scalar_lea.vmem [#allocation2], %s274
          %277 = vsyncadd %s272, 0
          %s278 = smul.addr %s27, 8
          %s279 = scalar_lea.hbm %s0, %s278
          %s281 = sshll.u32 %s279, 4
          %s282 = int_to_ptr.hbm [resolvable:$true] %s281
          %s283 = sshll.u32 %s275, 4
          %s284 = int_to_ptr.vmem [resolvable:$true] %s283
          %286 = dma.hbm_to_vmem [thread:$0]  %s282, 128, %s284, %s272
        $region36: #{tpu_custom_call.1} parent=31 // pred_fallthru
          _
        // Predicated region
        $region37: #{tpu_custom_call.1} parent=31 // pred_check
          %p287 = pneg %p73
        $region38: #{tpu_custom_call.1} parent=31 // pred_check_branch
          %289 = sbr.rel (%p287) target = $region40
        $region39: #{tpu_custom_call.1} parent=31 // pred_region
          %s290 = sand.u32 %s27, 1
          %s291 = scalar_lea.sflag [#allocation6], %s290
          %s292 = sand.u32 %s63, 1
          %s293 = smul.addr %s292, 8
          %s294 = scalar_lea.vmem [#allocation5], %s293
          %296 = vsyncadd %s291, 0
          %s297 = smul.addr %s27, 8
          %s298 = scalar_lea.hbm %s1, %s297
          %s300 = sshll.u32 %s298, 4
          %s301 = int_to_ptr.hbm [resolvable:$true] %s300
          %s302 = sshll.u32 %s294, 4
          %s303 = int_to_ptr.vmem [resolvable:$true] %s302
          %305 = dma.hbm_to_vmem [thread:$0]  %s301, 128, %s303, %s291
        $region40: #{tpu_custom_call.1} parent=31 // pred_fallthru
          _
      $region32: #{tpu_custom_call.1} parent=5 // pred_fallthru
        _
      %p306 = scmp.le.s32.totalorder 1, %s27
      %p307 = scmp.lt.s32.totalorder %s27, 3
      %p308 = pnand %p306, %p307
      %p309 = pneg %p308
      // Predicated region
      $region41: #{tpu_custom_call.1} parent=5 // pred_check
        _
      $region42: #{tpu_custom_call.1} parent=5 // pred_check_branch
        %311 = sbr.rel (%p308) target = $region44
      $region43: #{tpu_custom_call.1} parent=5 // pred_region
        %s312 = ssub.s32 %s27, 1
        %s313 = sand.u32 %s40, 1
        %s314 = scalar_lea.sflag [#allocation3], %s313
        %s315 = sand.u32 %s40, 1
        %s316 = smul.addr %s315, 8
        %s317 = scalar_lea.vmem [#allocation2], %s316
        // Predicated region
        $region45: #{tpu_custom_call.1} parent=43 // pred_check
          %p318 = pneg %p53
        $region46: #{tpu_custom_call.1} parent=43 // pred_check_branch
          %320 = sbr.rel (%p318) target = $region48
        $region47: #{tpu_custom_call.1} parent=43 // pred_region
          %322 = dma.done %s314, 128
        $region48: #{tpu_custom_call.1} parent=43 // pred_fallthru
          _
        %s323 = sand.u32 %s32, 1
        %s324 = scalar_lea.sflag [#allocation6], %s323
        %s325 = sand.u32 %s66, 1
        %s326 = smul.addr %s325, 8
        %s327 = scalar_lea.vmem [#allocation5], %s326
        // Predicated region
        $region49: #{tpu_custom_call.1} parent=43 // pred_check
          %p328 = pneg %p79
        $region50: #{tpu_custom_call.1} parent=43 // pred_check_branch
          %330 = sbr.rel (%p328) target = $region52
        $region51: #{tpu_custom_call.1} parent=43 // pred_region
          %332 = dma.done %s324, 128
        $region52: #{tpu_custom_call.1} parent=43 // pred_fallthru
          _
        // Predicated region
        $region53: #{tpu_custom_call.1} parent=43 // pred_check
          %p333 = pneg %p100
        $region54: #{tpu_custom_call.1} parent=43 // pred_check_branch
          %335 = sbr.rel (%p333) target = $region56
        $region55: #{tpu_custom_call.1} parent=43 // pred_region
          %337 = dma.done [#allocation6], 512
        $region56: #{tpu_custom_call.1} parent=43 // pred_fallthru
          _
        // Predicated region
        $region57: #{tpu_custom_call.1} parent=43 // pred_check
          %p338 = pneg %p142
        $region58: #{tpu_custom_call.1} parent=43 // pred_check_branch
          %340 = sbr.rel (%p338) target = $region60
        $region59: #{tpu_custom_call.1} parent=43 // pred_region
          %342 = dma.done [#allocation9], 512
        $region60: #{tpu_custom_call.1} parent=43 // pred_fallthru
          _
        %s343 = sand.u32 %s40, 1
        %s344 = scalar_lea.sflag [#allocation3], %s343
        %s345 = sand.u32 %s40, 1
        %s346 = smul.addr %s345, 8
        %s347 = scalar_lea.vmem [#allocation2], %s346
        %p348 = pneg %p53
        %p349 = pneg %p50
        %s350 = sand.u32 %s32, 1
        %s351 = scalar_lea.sflag [#allocation6], %s350
        %s352 = sand.u32 %s66, 1
        %s353 = smul.addr %s352, 8
        %s354 = scalar_lea.vmem [#allocation5], %s353
        %p355 = pneg %p79
        %p356 = pneg %p76
        %p357 = pneg %p100
        %p358 = pneg %p97
        %p359 = pneg %p121
        %p360 = pneg %p118
        %p361 = pneg %p142
        %p362 = pneg %p139
        %p363 = pneg %p163
        %p364 = pneg %p160
        %p365 = pneg %p189
        %p366 = pneg %p186
        %s367 = sand.u32 %s176, 1
        %s368 = scalar_lea.sflag [#allocation4], %s367
        %s369 = sand.u32 %s176, 1
        %s370 = smul.addr %s369, 8
        %s371 = scalar_lea.vmem [#allocation10], %s370
        %p372 = pneg %p215
        %p373 = pneg %p212
        %s374 = sand.u32 %s202, 1
        %s375 = scalar_lea.sflag [#allocation12], %s374
        %s376 = sand.u32 %s202, 1
        %s377 = smul.addr %s376, 8
        %s378 = scalar_lea.vmem [#allocation11], %s377
        %v379 = vld [vmem:[%s317] sm:$0xff]
        %v380 = vld [vmem:[%s327] sm:$0xff]
        %v381 = vld [vmem:[#allocation7] sm:$0xff]
        %v382 = vld [vmem:[#allocation7 + $0x8] sm:$0xff]
        %v383 = vld [vmem:[#allocation7 + $0x10] sm:$0xff]
        %v384 = vld [vmem:[#allocation7 + $0x18] sm:$0xff]
        %v385 = vld [vmem:[%s3] sm:$0x1]
        %v387 = vperm.slane %v385, 0
        %vm389 = vcmask 261120
        %v391 = vsel %vm389, %v379, 0
        %v394 = vsel %vm389, %v381, 0
        %v397 = vsel %vm389, %v382, 0
        %v400 = vsel %vm389, %v383, 0
        %v403 = vsel %vm389, %v384, 0
        %405 = vmatpush.xpose.msra.mxu0 0.0
        %406 = vmatpush.xpose.msra.mxu0 0.0
        %407 = vmatpush.xpose.msra.mxu0 0.0
        %408 = vmatpush.xpose.msra.mxu0 0.0
        %409 = vmatpush.xpose.msra.mxu0 0.0
        %410 = vmatpush.xpose.msra.mxu0 0.0
        %411 = vmatpush.xpose.msra.mxu0 0.0
        %412 = vmatpush.xpose.msra.mxu0 0.0
        %413 = vmatpush.xpose.msra.mxu0 0.0
        %414 = vmatpush.xpose.msra.mxu0 0.0
        %415 = vmatpush.xpose.msra.mxu0 0.0
        %416 = vmatpush.xpose.msra.mxu0 0.0
        %417 = vmatpush.xpose.msra.mxu0 %v403
        %418 = vmatpush.xpose.msra.mxu0 %v400
        %419 = vmatpush.xpose.msra.mxu0 %v397
        %420 = vmatpush.xpose.msra.mxu0 %v394
        %421 = vmatmul.f32.gmra.mxu0 %v391
        %v422 = vpop.f32.mrf.mxu0
        %v423 = vadd.f32 %v387, %v422
        %424 = vdwg.mxu0
        %v425 = vmul.f32 %v423, 0.5
        %v426 = vtanh.pop %v425
        %v427 = vadd.f32 %v426, 1.0
        %v428 = vmul.f32 %v427, 0.5
        %v429 = vmul.f32 %v380, %v428
        %430 = vst.msk [vmem:[%s378] sm:$0xff] %vm389, %v429
        %v431 = vld [vmem:[#allocation8] sm:$0xff]
        %v432 = vld [vmem:[#allocation8 + $0x8] sm:$0xff]
        %v433 = vld [vmem:[#allocation8 + $0x10] sm:$0xff]
        %v434 = vld [vmem:[#allocation8 + $0x18] sm:$0xff]
        %v435 = vld [vmem:[%s5] sm:$0x1]
        %v437 = vperm.slane %v435, 0
        %v440 = vsel %vm389, %v380, 0
        %v443 = vsel %vm389, %v431, 0
        %v446 = vsel %vm389, %v432, 0
        %v449 = vsel %vm389, %v433, 0
        %v452 = vsel %vm389, %v434, 0
        %454 = vmatpush.xpose.msra.mxu0 0.0
        %455 = vmatpush.xpose.msra.mxu0 0.0
        %456 = vmatpush.xpose.msra.mxu0 0.0
        %457 = vmatpush.xpose.msra.mxu0 0.0
        %458 = vmatpush.xpose.msra.mxu0 0.0
        %459 = vmatpush.xpose.msra.mxu0 0.0
        %460 = vmatpush.xpose.msra.mxu0 0.0
        %461 = vmatpush.xpose.msra.mxu0 0.0
        %462 = vmatpush.xpose.msra.mxu0 0.0
        %463 = vmatpush.xpose.msra.mxu0 0.0
        %464 = vmatpush.xpose.msra.mxu0 0.0
        %465 = vmatpush.xpose.msra.mxu0 0.0
        %466 = vmatpush.xpose.msra.mxu0 %v452
        %467 = vmatpush.xpose.msra.mxu0 %v449
        %468 = vmatpush.xpose.msra.mxu0 %v446
        %469 = vmatpush.xpose.msra.mxu0 %v443
        %470 = vmatmul.f32.gmra.mxu0 %v440
        %v471 = vpop.f32.mrf.mxu0
        %v472 = vadd.f32 %v437, %v471
        %473 = vdwg.mxu0
        %v474 = vmul.f32 %v472, 0.5
        %v475 = vtanh.pop %v474
        %v476 = vadd.f32 %v475, 1.0
        %v477 = vmul.f32 %v476, 0.5
        %v478 = vmul.f32 %v379, %v477
        %479 = vst.msk [vmem:[%s371] sm:$0xff] %vm389, %v478
        %s480 = sand.u32 %s176, 1
        %s481 = scalar_lea.sflag [#allocation4], %s480
        %s482 = sand.u32 %s176, 1
        %s483 = smul.addr %s482, 8
        %s484 = scalar_lea.vmem [#allocation10], %s483
        %s485 = sand.u32 %s202, 1
        %s486 = scalar_lea.sflag [#allocation12], %s485
        %s487 = sand.u32 %s202, 1
        %s488 = smul.addr %s487, 8
        %s489 = scalar_lea.vmem [#allocation11], %s488
        // Predicated region
        $region61: #{tpu_custom_call.1} parent=43 // pred_check
          %p490 = pneg %p186
        $region62: #{tpu_custom_call.1} parent=43 // pred_check_branch
          %492 = sbr.rel (%p490) target = $region64
        $region63: #{tpu_custom_call.1} parent=43 // pred_region
          %494 = vsyncadd %s481, 0
          %s495 = smul.addr %s32, 8
          %s496 = scalar_lea.hbm %s6, %s495
          %s498 = sshll.u32 %s484, 4
          %s499 = int_to_ptr.vmem [resolvable:$true] %s498
          %s500 = sshll.u32 %s496, 4
          %s501 = int_to_ptr.hbm [resolvable:$true] %s500
          %503 = dma.vmem_to_hbm [thread:$0]  %s499, 128, %s501, %s481
        $region64: #{tpu_custom_call.1} parent=43 // pred_fallthru
          _
        // Predicated region
        $region65: #{tpu_custom_call.1} parent=43 // pred_check
          %p504 = pneg %p212
        $region66: #{tpu_custom_call.1} parent=43 // pred_check_branch
          %506 = sbr.rel (%p504) target = $region68
        $region67: #{tpu_custom_call.1} parent=43 // pred_region
          %508 = vsyncadd %s486, 0
          %s509 = smul.addr %s32, 8
          %s510 = scalar_lea.hbm %s7, %s509
          %s512 = sshll.u32 %s489, 4
          %s513 = int_to_ptr.vmem [resolvable:$true] %s512
          %s514 = sshll.u32 %s510, 4
          %s515 = int_to_ptr.hbm [resolvable:$true] %s514
          %517 = dma.vmem_to_hbm [thread:$0]  %s513, 128, %s515, %s486
        $region68: #{tpu_custom_call.1} parent=43 // pred_fallthru
          _
      $region44: #{tpu_custom_call.1} parent=5 // pred_fallthru
        _
      %p518 = scmp.le.s32.totalorder 2, %s27
      // Predicated region
      $region69: #{tpu_custom_call.1} parent=5 // pred_check
        %p519 = pneg %p518
      $region70: #{tpu_custom_call.1} parent=5 // pred_check_branch
        %521 = sbr.rel (%p519) target = $region72
      $region71: #{tpu_custom_call.1} parent=5 // pred_region
        %s522 = ssub.s32 %s27, 2
        // Predicated region
        $region73: #{tpu_custom_call.1} parent=71 // pred_check
          %p523 = pneg %p192
        $region74: #{tpu_custom_call.1} parent=71 // pred_check_branch
          %525 = sbr.rel (%p523) target = $region76
        $region75: #{tpu_custom_call.1} parent=71 // pred_region
          %s526 = sand.u32 %s177, 1
          %s527 = scalar_lea.sflag [#allocation4], %s526
          %s528 = sand.u32 %s177, 1
          %s529 = smul.addr %s528, 8
          %s530 = scalar_lea.vmem [#allocation10], %s529
          %532 = dma.done %s527, 128
        $region76: #{tpu_custom_call.1} parent=71 // pred_fallthru
          _
        // Predicated region
        $region77: #{tpu_custom_call.1} parent=71 // pred_check
          %p533 = pneg %p218
        $region78: #{tpu_custom_call.1} parent=71 // pred_check_branch
          %535 = sbr.rel (%p533) target = $region80
        $region79: #{tpu_custom_call.1} parent=71 // pred_region
          %s536 = sand.u32 %s203, 1
          %s537 = scalar_lea.sflag [#allocation12], %s536
          %s538 = sand.u32 %s203, 1
          %s539 = smul.addr %s538, 8
          %s540 = scalar_lea.vmem [#allocation11], %s539
          %542 = dma.done %s537, 128
        $region80: #{tpu_custom_call.1} parent=71 // pred_fallthru
          _
      $region72: #{tpu_custom_call.1} parent=5 // pred_fallthru
        _
    $region6: #{tpu_custom_call.1} parent=1 // loop_footer
      %s31 = sadd.s32 1, %s27
    $region7: #{tpu_custom_call.1} parent=1 // loop_footer_branch
      %26 = sbr.rel target = $region3
    $region8: #{tpu_custom_call.1} parent=1 // loop_exit
      _
    %543 = vsyncpa [#allocation3], 1
    %s544 = scalar_lea.sflag [#allocation3], 1
    %545 = vsyncpa %s544, 1
    %546 = vsyncpa [#allocation6], 1
    %s547 = scalar_lea.sflag [#allocation6], 1
    %548 = vsyncpa %s547, 1
    %549 = vsyncpa [#allocation9], 1
    %550 = vsyncpa [#allocation4], 1
    %s551 = scalar_lea.sflag [#allocation4], 1
    %552 = vsyncpa %s551, 1
    %553 = vsyncpa [#allocation12], 1
    %s554 = scalar_lea.sflag [#allocation12], 1
    %555 = vsyncpa %s554, 1

</llo_original>
